<compile_context>
chip_gen: v6e
topology: v6e:2x2x1
jax: 0.10.0
libtpu: 0.0.40
codegen_flags: <defaults>
</compile_context>

<pallas_src>
import functools

import jax
import jax.numpy as jnp
from jax import lax
from jax.experimental import pallas as pl
from jax.experimental.pallas import tpu as pltpu


def _round_up(n, m):
    return ((n + m - 1) // m) * m


# ---------------------------------------------------------------------------
# Kernel bodies
# ---------------------------------------------------------------------------
def _mlp_q(x_ref, w1_ref, b1_ref, w2_ref, b2_ref, w3_ref, b3_ref):
    """Fused 3-layer MLP. Matmul inputs in w*.dtype (bf16 or f32), f32 accum,
    f32 bias/ReLU epilogue on the VPU."""
    mm = w1_ref.dtype
    h = jnp.dot(x_ref[...], w1_ref[...], preferred_element_type=jnp.float32)
    h = jnp.maximum(h + b1_ref[...], 0.0)
    h = jnp.dot(h.astype(mm), w2_ref[...], preferred_element_type=jnp.float32)
    h = jnp.maximum(h + b2_ref[...], 0.0)
    q = jnp.dot(h.astype(mm), w3_ref[...], preferred_element_type=jnp.float32)
    return q + b3_ref[...]


def _q_kernel(x_ref, w1_ref, b1_ref, w2_ref, b2_ref, w3_ref, b3_ref, q_ref):
    # Module-semantics path: store Q-values (unpadded columns -> minimal HBM
    # write traffic; masked vst on <128 lanes is far cheaper than 16x bytes).
    q = _mlp_q(x_ref, w1_ref, b1_ref, w2_ref, b2_ref, w3_ref, b3_ref)
    q_ref[...] = q.astype(q_ref.dtype)


def _action_kernel(x_ref, w1_ref, b1_ref, w2_ref, b2_ref, w3_ref, b3_ref, a_ref):
    # DQN greedy env-step path: Q-values never leave VMEM; only int32 actions
    # are written back.  First-max tie-break matches jnp.argmax.
    q = _mlp_q(x_ref, w1_ref, b1_ref, w2_ref, b2_ref, w3_ref, b3_ref)
    lane = lax.broadcasted_iota(jnp.int32, q.shape, 1)
    q_max = jnp.max(q, axis=1, keepdims=True)
    idx = jnp.where(q == q_max, lane, q.shape[1])
    a_ref[...] = jnp.min(idx, axis=1, keepdims=True).astype(a_ref.dtype)


# ---------------------------------------------------------------------------
# pallas_call wrappers
# ---------------------------------------------------------------------------
def _pad_and_tile(x, tile_b):
    batch = x.shape[0]
    b_aligned = _round_up(max(batch, 1), 8)           # sublane alignment
    # Cap the tile so big batches give the "parallel" axis >= 2 grid steps
    # (v7x has 2 TensorCores); tiny batches degenerate to a single step.
    tb = max(8, min(tile_b, _round_up(pl.cdiv(b_aligned, 2), 8)))
    b_pad = _round_up(b_aligned, tb)
    if b_pad != batch:
        x = jnp.pad(x, ((0, b_pad - batch), (0, 0)))
    return x, tb, b_pad


def _fused_call(kernel, x, params, tb, b_pad, out_cols, out_dtype, matmul_dtype):
    w1, b1, w2, b2, w3, b3 = params
    in_size = x.shape[1]
    hidden = w1.shape[1]
    out_size = w3.shape[1]

    # bf16 matmul inputs (native MXU rate, half the DMA bytes); biases stay f32.
    x = x.astype(matmul_dtype)
    w1 = w1.astype(matmul_dtype)
    w2 = w2.astype(matmul_dtype)
    w3 = w3.astype(matmul_dtype)

    # Whole-array, single-buffered VMEM residency for the (tiny) constants —
    # no per-step pipeline bookkeeping, no second buffer.
    resident = pl.BlockSpec(memory_space=pltpu.MemorySpace.VMEM)

    w_isz = jnp.dtype(matmul_dtype).itemsize
    flops = 2 * b_pad * (in_size * hidden + hidden * hidden + hidden * out_size)
    bytes_accessed = (
        b_pad * in_size * w_isz
        + (in_size * hidden + hidden * hidden + hidden * out_size) * w_isz
        + (2 * hidden + out_size) * 4
        + b_pad * out_cols * jnp.dtype(out_dtype).itemsize)

    return pl.pallas_call(
        kernel,
        grid=(b_pad // tb,),
        in_specs=[
            pl.BlockSpec((tb, in_size), lambda i: (i, 0)),
            resident, resident, resident, resident, resident, resident,
        ],
        out_specs=pl.BlockSpec((tb, out_cols), lambda i: (i, 0)),
        out_shape=jax.ShapeDtypeStruct((b_pad, out_cols), out_dtype),
        compiler_params=pltpu.CompilerParams(
            dimension_semantics=("parallel",)),
        cost_estimate=pl.CostEstimate(
            flops=flops, transcendentals=0, bytes_accessed=bytes_accessed),
    )(x, w1, b1, w2, b2, w3, b3)


@functools.partial(jax.jit, static_argnames=("tile_b", "matmul_dtype"))
def net_forward(x, params, tile_b=512, matmul_dtype=jnp.bfloat16):
    """Exact semantics of Net.forward: returns Q-values, shape (batch, out)."""
    batch = x.shape[0]
    out_size = params[4].shape[1]
    xp, tb, b_pad = _pad_and_tile(x, tile_b)
    q = _fused_call(_q_kernel, xp, params, tb, b_pad, out_size, x.dtype,
                    matmul_dtype)
    return q[:batch]


@functools.partial(jax.jit, static_argnames=("tile_b", "matmul_dtype"))
def net_select_action(x, params, tile_b=512, matmul_dtype=jnp.bfloat16):
    """Fused forward + greedy argmax; Q-values never written to HBM."""
    batch = x.shape[0]
    xp, tb, b_pad = _pad_and_tile(x, tile_b)
    a = _fused_call(_action_kernel, xp, params, tb, b_pad, 1, jnp.int32,
                    matmul_dtype)
    return a[:batch, 0]


# ---------------------------------------------------------------------------
# Params & reference
# ---------------------------------------------------------------------------
def init_params(key, input_size, hidden_size, output_size):
    """Mimic Net.__init__: weights ~ N(0, 0.1), biases zero; stored (in, out)."""
    k1, k2, k3 = jax.random.split(key, 3)
    w1 = 0.1 * jax.random.normal(k1, (input_size, hidden_size), jnp.float32)
    b1 = jnp.zeros((1, hidden_size), jnp.float32)
    w2 = 0.1 * jax.random.normal(k2, (hidden_size, hidden_size), jnp.float32)
    b2 = jnp.zeros((1, hidden_size), jnp.float32)
    w3 = 0.1 * jax.random.normal(k3, (hidden_size, output_size), jnp.float32)
    b3 = jnp.zeros((1, output_size), jnp.float32)
    return (w1, b1, w2, b2, w3, b3)


def net_forward_ref(x, params):
    """Pure-JAX f32 reference matching the PyTorch module."""
    w1, b1, w2, b2, w3, b3 = params
    h = jnp.maximum(x @ w1 + b1, 0.0)
    h = jnp.maximum(h @ w2 + b2, 0.0)
    return h @ w3 + b3


if __name__ == "__main__":
    batch = 2
    input_size = 16
    hidden_size = 32   # note: hidden=128 would be essentially free on the MXU
    output_size = 8

    key = jax.random.PRNGKey(0)
    kx, kp = jax.random.split(key)
    x = jax.random.normal(kx, (batch, input_size), jnp.float32)
    params = init_params(kp, input_size, hidden_size, output_size)

    q = jax.block_until_ready(net_forward(x, params))
    act = jax.block_until_ready(net_select_action(x, params))
    ref = net_forward_ref(x, params)

    assert q.shape == (batch, output_size)
    assert act.shape == (batch,)
    # bf16 MXU inputs + f32 accumulation vs the f32 reference: loose tolerance.
    assert jnp.allclose(q, ref, atol=3e-2, rtol=1e-2), float(jnp.max(jnp.abs(q - ref)))
    # Fused greedy action matches argmax of the kernel's own Q-values.
    assert bool(jnp.all(act == jnp.argmax(q, axis=1)))

    # Exact-f32 matmul path (same kernel, matmul_dtype=f32) matches tightly.
    q32 = jax.block_until_ready(net_forward(x, params, matmul_dtype=jnp.float32))
    assert jnp.allclose(q32, ref, atol=1e-5, rtol=1e-5)

    print("KERNEL_OK")
</pallas_src>

<mosaic_0001>
module attributes {stable_mosaic.version = 11 : i64} {
  func.func @_q_kernel(%arg0: i32, %arg1: memref<8x16xbf16, #tpu.memory_space<vmem>>, %arg2: memref<16x32xbf16, #tpu.memory_space<vmem>>, %arg3: memref<1x32xf32, #tpu.memory_space<vmem>>, %arg4: memref<32x32xbf16, #tpu.memory_space<vmem>>, %arg5: memref<1x32xf32, #tpu.memory_space<vmem>>, %arg6: memref<32x8xbf16, #tpu.memory_space<vmem>>, %arg7: memref<1x8xf32, #tpu.memory_space<vmem>>, %arg8: memref<8x8xf32, #tpu.memory_space<vmem>>) attributes {dimension_semantics = [#tpu.dimension_semantics<parallel>], iteration_bounds = array<i64: 1>, scalar_prefetch = 0 : i64, scratch_operands = 0 : i64, tpu.core_type = #tpu.core_type<tc>, window_params = [{transform_indices = @transform_0, window_bounds = array<i64: 8, 16>}, {pipeline_mode = #tpu.pipeline_mode<synchronous>, transform_indices = @transform_1, window_bounds = array<i64: 16, 32>}, {pipeline_mode = #tpu.pipeline_mode<synchronous>, transform_indices = @transform_2, window_bounds = array<i64: 1, 32>}, {pipeline_mode = #tpu.pipeline_mode<synchronous>, transform_indices = @transform_3, window_bounds = array<i64: 32, 32>}, {pipeline_mode = #tpu.pipeline_mode<synchronous>, transform_indices = @transform_4, window_bounds = array<i64: 1, 32>}, {pipeline_mode = #tpu.pipeline_mode<synchronous>, transform_indices = @transform_5, window_bounds = array<i64: 32, 8>}, {pipeline_mode = #tpu.pipeline_mode<synchronous>, transform_indices = @transform_6, window_bounds = array<i64: 1, 8>}, {transform_indices = @transform_7, window_bounds = array<i64: 8, 8>}]} {
    %c0 = arith.constant 0 : index
    %c0_0 = arith.constant 0 : index
    %0 = vector.load %arg1[%c0, %c0_0] : memref<8x16xbf16, #tpu.memory_space<vmem>>, vector<8x16xbf16>
    %c0_1 = arith.constant 0 : index
    %c0_2 = arith.constant 0 : index
    %1 = vector.load %arg2[%c0_1, %c0_2] : memref<16x32xbf16, #tpu.memory_space<vmem>>, vector<16x32xbf16>
    %cst = arith.constant dense<0.000000e+00> : vector<8x32xf32>
    %2 = tpu.matmul %0, %1, %cst {dimension_numbers = #tpu.dot_dimension_numbers<[1], [0], [0], [1], [0, 0, 1, 1], [], []>} : vector<8x16xbf16>, vector<16x32xbf16>, vector<8x32xf32> -> vector<8x32xf32>
    %c0_3 = arith.constant 0 : index
    %c0_4 = arith.constant 0 : index
    %3 = vector.load %arg3[%c0_3, %c0_4] : memref<1x32xf32, #tpu.memory_space<vmem>>, vector<1x32xf32>
    %4 = vector.broadcast %3 : vector<1x32xf32> to vector<8x32xf32>
    %5 = arith.addf %2, %4 : vector<8x32xf32>
    %cst_5 = arith.constant 0.000000e+00 : f32
    %6 = vector.broadcast %cst_5 : f32 to vector<8x32xf32>
    %7 = arith.maximumf %5, %6 : vector<8x32xf32>
    %8 = arith.truncf %7 : vector<8x32xf32> to vector<8x32xbf16>
    %c0_6 = arith.constant 0 : index
    %c0_7 = arith.constant 0 : index
    %9 = vector.load %arg4[%c0_6, %c0_7] : memref<32x32xbf16, #tpu.memory_space<vmem>>, vector<32x32xbf16>
    %cst_8 = arith.constant dense<0.000000e+00> : vector<8x32xf32>
    %10 = tpu.matmul %8, %9, %cst_8 {dimension_numbers = #tpu.dot_dimension_numbers<[1], [0], [0], [1], [0, 0, 1, 1], [], []>} : vector<8x32xbf16>, vector<32x32xbf16>, vector<8x32xf32> -> vector<8x32xf32>
    %c0_9 = arith.constant 0 : index
    %c0_10 = arith.constant 0 : index
    %11 = vector.load %arg5[%c0_9, %c0_10] : memref<1x32xf32, #tpu.memory_space<vmem>>, vector<1x32xf32>
    %12 = vector.broadcast %11 : vector<1x32xf32> to vector<8x32xf32>
    %13 = arith.addf %10, %12 : vector<8x32xf32>
    %cst_11 = arith.constant 0.000000e+00 : f32
    %14 = vector.broadcast %cst_11 : f32 to vector<8x32xf32>
    %15 = arith.maximumf %13, %14 : vector<8x32xf32>
    %16 = arith.truncf %15 : vector<8x32xf32> to vector<8x32xbf16>
    %c0_12 = arith.constant 0 : index
    %c0_13 = arith.constant 0 : index
    %17 = vector.load %arg6[%c0_12, %c0_13] : memref<32x8xbf16, #tpu.memory_space<vmem>>, vector<32x8xbf16>
    %cst_14 = arith.constant dense<0.000000e+00> : vector<8x8xf32>
    %18 = tpu.matmul %16, %17, %cst_14 {dimension_numbers = #tpu.dot_dimension_numbers<[1], [0], [0], [1], [0, 0, 1, 1], [], []>} : vector<8x32xbf16>, vector<32x8xbf16>, vector<8x8xf32> -> vector<8x8xf32>
    %c0_15 = arith.constant 0 : index
    %c0_16 = arith.constant 0 : index
    %19 = vector.load %arg7[%c0_15, %c0_16] : memref<1x8xf32, #tpu.memory_space<vmem>>, vector<1x8xf32>
    %20 = vector.broadcast %19 : vector<1x8xf32> to vector<8x8xf32>
    %21 = arith.addf %18, %20 : vector<8x8xf32>
    %c0_17 = arith.constant 0 : index
    %c0_18 = arith.constant 0 : index
    %22 = vector.load %arg8[%c0_17, %c0_18] : memref<8x8xf32, #tpu.memory_space<vmem>>, vector<8x8xf32>
    tpu.vector_store %arg8[%c0_17, %c0_18], %21 {strides = array<i32>} : memref<8x8xf32, #tpu.memory_space<vmem>>, vector<8x8xf32>,
    return
  }
  func.func @transform_0(%arg0: i32) -> (i32, i32) {
    %c0_i32 = arith.constant 0 : i32
    %c0_i32_0 = arith.constant 0 : i32
    return %arg0, %c0_i32 : i32, i32
  }
  func.func @transform_1(%arg0: i32) -> (i32, i32) {
    %c0_i32 = arith.constant 0 : i32
    %c0_i32_0 = arith.constant 0 : i32
    %c0_i32_1 = arith.constant 0 : i32
    return %c0_i32, %c0_i32_0 : i32, i32
  }
  func.func @transform_2(%arg0: i32) -> (i32, i32) {
    %c0_i32 = arith.constant 0 : i32
    %c0_i32_0 = arith.constant 0 : i32
    %c0_i32_1 = arith.constant 0 : i32
    return %c0_i32, %c0_i32_0 : i32, i32
  }
  func.func @transform_3(%arg0: i32) -> (i32, i32) {
    %c0_i32 = arith.constant 0 : i32
    %c0_i32_0 = arith.constant 0 : i32
    %c0_i32_1 = arith.constant 0 : i32
    return %c0_i32, %c0_i32_0 : i32, i32
  }
  func.func @transform_4(%arg0: i32) -> (i32, i32) {
    %c0_i32 = arith.constant 0 : i32
    %c0_i32_0 = arith.constant 0 : i32
    %c0_i32_1 = arith.constant 0 : i32
    return %c0_i32, %c0_i32_0 : i32, i32
  }
  func.func @transform_5(%arg0: i32) -> (i32, i32) {
    %c0_i32 = arith.constant 0 : i32
    %c0_i32_0 = arith.constant 0 : i32
    %c0_i32_1 = arith.constant 0 : i32
    return %c0_i32, %c0_i32_0 : i32, i32
  }
  func.func @transform_6(%arg0: i32) -> (i32, i32) {
    %c0_i32 = arith.constant 0 : i32
    %c0_i32_0 = arith.constant 0 : i32
    %c0_i32_1 = arith.constant 0 : i32
    return %c0_i32, %c0_i32_0 : i32, i32
  }
  func.func @transform_7(%arg0: i32) -> (i32, i32) {
    %c0_i32 = arith.constant 0 : i32
    %c0_i32_0 = arith.constant 0 : i32
    return %arg0, %c0_i32 : i32, i32
  }
}

</mosaic_0001>

<llo_original>
// kernel: net_forward.1
$region0: #{net_forward.1}
  #allocation0 [shape = 'u32[]', space=smem, size = 0x4, offset = 0x4, fixed_abs, tag = 'smem constant byte address 0x4 - core index']
  #allocation1 [shape = 'u32[144,128]{1,0:T(1,128)}', space=vmem, size = 0x12000, scoped, tag = 'internal scratch']
  %s0 = inlined_call_operand.vmem [shape: bf16[8,16], index: 0, kind: input, shape index: {}]
  %s1 = inlined_call_operand.vmem [shape: bf16[16,32], index: 1, kind: input, shape index: {}]
  %s2 = inlined_call_operand.vmem [shape: f32[1,32], index: 2, kind: input, shape index: {}]
  %s3 = inlined_call_operand.vmem [shape: bf16[32,32], index: 3, kind: input, shape index: {}]
  %s4 = inlined_call_operand.vmem [shape: f32[1,32], index: 4, kind: input, shape index: {}]
  %s5 = inlined_call_operand.vmem [shape: bf16[32,8], index: 5, kind: input, shape index: {}]
  %s6 = inlined_call_operand.vmem [shape: f32[1,8], index: 6, kind: input, shape index: {}]
  %s7 = inlined_call_operand.vmem [shape: f32[8,8], index: 7, kind: output, shape index: {}]
  %s8 = sld [smem:[#allocation0]]
  $region38: #{net_forward.1} parent=0
    _
  %s10 = ssub.s32 1, %s8
  %s11 = scalar_select 0, %s10, %s8
  // Predicated region
  $region2: #{net_forward.1} parent=0 // pred_check
    _
  $region3: #{net_forward.1} parent=0 // pred_check_branch
    %13 = sbr.rel (0) target = $region5
  $region4: #{net_forward.1} parent=0 // pred_region
    _
  $region5: #{net_forward.1} parent=0 // pred_fallthru
    _
  // Predicated region
  $region6: #{net_forward.1} parent=0 // pred_check
    _
  $region7: #{net_forward.1} parent=0 // pred_check_branch
    %15 = sbr.rel (0) target = $region9
  $region8: #{net_forward.1} parent=0 // pred_region
    _
  $region9: #{net_forward.1} parent=0 // pred_fallthru
    _
  // Predicated region
  $region10: #{net_forward.1} parent=0 // pred_check
    _
  $region11: #{net_forward.1} parent=0 // pred_check_branch
    %17 = sbr.rel (0) target = $region13
  $region12: #{net_forward.1} parent=0 // pred_region
    _
  $region13: #{net_forward.1} parent=0 // pred_fallthru
    _
  // Predicated region
  $region14: #{net_forward.1} parent=0 // pred_check
    _
  $region15: #{net_forward.1} parent=0 // pred_check_branch
    %19 = sbr.rel (0) target = $region17
  $region16: #{net_forward.1} parent=0 // pred_region
    _
  $region17: #{net_forward.1} parent=0 // pred_fallthru
    _
  // Predicated region
  $region18: #{net_forward.1} parent=0 // pred_check
    _
  $region19: #{net_forward.1} parent=0 // pred_check_branch
    %21 = sbr.rel (0) target = $region21
  $region20: #{net_forward.1} parent=0 // pred_region
    _
  $region21: #{net_forward.1} parent=0 // pred_fallthru
    _
  // Predicated region
  $region22: #{net_forward.1} parent=0 // pred_check
    _
  $region23: #{net_forward.1} parent=0 // pred_check_branch
    %23 = sbr.rel (0) target = $region25
  $region24: #{net_forward.1} parent=0 // pred_region
    _
  $region25: #{net_forward.1} parent=0 // pred_fallthru
    _
  // Predicated region
  $region26: #{net_forward.1} parent=0 // pred_check
    _
  $region27: #{net_forward.1} parent=0 // pred_check_branch
    %25 = sbr.rel (0) target = $region29
  $region28: #{net_forward.1} parent=0 // pred_region
    _
  $region29: #{net_forward.1} parent=0 // pred_fallthru
    _
  %v27 = vld [vmem:[%s0] sm:$0xf]
  %v28 = vld [vmem:[%s1] sm:$0xf]
  %v29 = vld [vmem:[%s1 + $0x4] sm:$0xf]
  %v30 = vld [vmem:[%s2] sm:$0x1]
  %v32 = vlaneseq
  %v33 = vshrl.u32 %v32, 7
  %v34 = vsub.s32 0, %v33
  %v35 = vrot.slane %v30, %v34
  %v39 = vunpack.c.l.b16 %v28
  %v40 = vunpack.c.l.b16 %v29
  %v41 = vpack.c.b16 %v40, %v39
  %vm43 = vcmask 130048
  %v45 = vsel %vm43, %v27, 0
  %47 = vmatprep.subr.bf16.mxu0 0
  %48 = vmatpush1.bf16.msra.mxu0 0
  %49 = vmatprep.subr.bf16.mxu0 0
  %50 = vmatpush1.bf16.msra.mxu0 0
  %51 = vmatprep.subr.bf16.mxu0 0
  %52 = vmatpush1.bf16.msra.mxu0 0
  %53 = vmatprep.subr.bf16.mxu0 0
  %54 = vmatpush1.bf16.msra.mxu0 0
  %55 = vmatprep.subr.bf16.mxu0 0
  %56 = vmatpush1.bf16.msra.mxu0 0
  %57 = vmatprep.subr.bf16.mxu0 0
  %58 = vmatpush1.bf16.msra.mxu0 0
  %59 = vmatprep.subr.bf16.mxu0 0
  %60 = vmatpush1.bf16.msra.mxu0 0
  %61 = vmatprep.subr.bf16.mxu0 0
  %62 = vmatpush1.bf16.msra.mxu0 %v41
  %63 = vmatprep.subr.bf16.mxu0 0
  %64 = vmatpush2.bf16.msra.mxu0 0
  %65 = vmatprep.subr.bf16.mxu0 0
  %66 = vmatpush2.bf16.msra.mxu0 0
  %67 = vmatprep.subr.bf16.mxu0 0
  %68 = vmatpush2.bf16.msra.mxu0 0
  %69 = vmatprep.subr.bf16.mxu0 0
  %70 = vmatpush2.bf16.msra.mxu0 0
  %71 = vmatprep.subr.bf16.mxu0 0
  %72 = vmatpush2.bf16.msra.mxu0 0
  %73 = vmatprep.subr.bf16.mxu0 0
  %74 = vmatpush2.bf16.msra.mxu0 0
  %75 = vmatprep.subr.bf16.mxu0 0
  %76 = vmatpush2.bf16.msra.mxu0 0
  %77 = vmatprep.subr.bf16.mxu0 0
  %78 = vmatpush2.bf16.msra.mxu0 0
  %79 = vmatprep.mubr.bf16.mxu0 0
  %80 = vmatmul.mubr.bf16.gmra.mxu0 %v45
  %v81 = vpop.f32.mrf.mxu0
  %v82 = vadd.f32 %v35, %v81
  %v83 = vpop.f32.mrf.mxu0
  %v84 = vpop.f32.mrf.mxu0
  %v85 = vpop.f32.mrf.mxu0
  %86 = vdwg.mxu0
  %v87 = vmax.f32 %v82, 0.0
  %v88 = vpack.c.bf16 %v87, %v87
  %v89 = vld [vmem:[%s3] sm:$0xf]
  %v90 = vld [vmem:[%s3 + $0x4] sm:$0xf]
  %v91 = vld [vmem:[%s3 + $0x8] sm:$0xf]
  %v92 = vld [vmem:[%s3 + $0xc] sm:$0xf]
  %v93 = vld [vmem:[%s4] sm:$0x1]
  %v95 = vlaneseq
  %v96 = vshrl.u32 %v95, 7
  %v97 = vsub.s32 0, %v96
  %v98 = vrot.slane %v93, %v97
  %v104 = vunpack.c.l.b16 %v89
  %v105 = vunpack.c.l.b16 %v90
  %v106 = vunpack.c.l.b16 %v91
  %v107 = vunpack.c.l.b16 %v92
  %v108 = vpack.c.b16 %v105, %v104
  %v109 = vpack.c.b16 %v107, %v106
  %vm112 = vcmask 261120
  %v114 = vsel %vm112, %v88, 0
  %116 = vmatprep.subr.bf16.mxu0 0
  %117 = vmatpush1.bf16.msra.mxu0 0
  %118 = vmatprep.subr.bf16.mxu0 0
  %119 = vmatpush1.bf16.msra.mxu0 0
  %120 = vmatprep.subr.bf16.mxu0 0
  %121 = vmatpush1.bf16.msra.mxu0 0
  %122 = vmatprep.subr.bf16.mxu0 0
  %123 = vmatpush1.bf16.msra.mxu0 0
  %124 = vmatprep.subr.bf16.mxu0 0
  %125 = vmatpush1.bf16.msra.mxu0 0
  %126 = vmatprep.subr.bf16.mxu0 0
  %127 = vmatpush1.bf16.msra.mxu0 0
  %128 = vmatprep.subr.bf16.mxu0 0
  %129 = vmatpush1.bf16.msra.mxu0 %v109
  %130 = vmatprep.subr.bf16.mxu0 0
  %131 = vmatpush1.bf16.msra.mxu0 %v108
  %132 = vmatprep.subr.bf16.mxu0 0
  %133 = vmatpush2.bf16.msra.mxu0 0
  %134 = vmatprep.subr.bf16.mxu0 0
  %135 = vmatpush2.bf16.msra.mxu0 0
  %136 = vmatprep.subr.bf16.mxu0 0
  %137 = vmatpush2.bf16.msra.mxu0 0
  %138 = vmatprep.subr.bf16.mxu0 0
  %139 = vmatpush2.bf16.msra.mxu0 0
  %140 = vmatprep.subr.bf16.mxu0 0
  %141 = vmatpush2.bf16.msra.mxu0 0
  %142 = vmatprep.subr.bf16.mxu0 0
  %143 = vmatpush2.bf16.msra.mxu0 0
  %144 = vmatprep.subr.bf16.mxu0 0
  %145 = vmatpush2.bf16.msra.mxu0 0
  %146 = vmatprep.subr.bf16.mxu0 0
  %147 = vmatpush2.bf16.msra.mxu0 0
  %148 = vmatprep.mubr.bf16.mxu0 0
  %149 = vmatmul.mubr.bf16.gmra.mxu0 %v114
  %v150 = vpop.f32.mrf.mxu0
  %v151 = vadd.f32 %v98, %v150
  %v152 = vpop.f32.mrf.mxu0
  %v153 = vpop.f32.mrf.mxu0
  %v154 = vpop.f32.mrf.mxu0
  %155 = vdwg.mxu0
  %v156 = vmax.f32 %v151, 0.0
  %v157 = vpack.c.bf16 %v156, %v156
  %v158 = vld [vmem:[%s5] sm:$0xf]
  %v159 = vld [vmem:[%s5 + $0x4] sm:$0xf]
  %v160 = vld [vmem:[%s5 + $0x8] sm:$0xf]
  %v161 = vld [vmem:[%s5 + $0xc] sm:$0xf]
  %v162 = vld [vmem:[%s6] sm:$0x1]
  %v164 = vlaneseq
  %v165 = vshrl.u32 %v164, 7
  %v166 = vsub.s32 0, %v165
  %v167 = vrot.slane %v162, %v166
  %v173 = vunpack.c.l.b16 %v158
  %v174 = vunpack.c.l.b16 %v159
  %v175 = vunpack.c.l.b16 %v160
  %v176 = vunpack.c.l.b16 %v161
  %v177 = vpack.c.b16 %v174, %v173
  %v178 = vpack.c.b16 %v176, %v175
  %v182 = vsel %vm112, %v157, 0
  %184 = vmatprep.subr.bf16.mxu0 0
  %185 = vmatpush1.bf16.msra.mxu0 0
  %186 = vmatprep.subr.bf16.mxu0 0
  %187 = vmatpush1.bf16.msra.mxu0 0
  %188 = vmatprep.subr.bf16.mxu0 0
  %189 = vmatpush1.bf16.msra.mxu0 0
  %190 = vmatprep.subr.bf16.mxu0 0
  %191 = vmatpush1.bf16.msra.mxu0 0
  %192 = vmatprep.subr.bf16.mxu0 0
  %193 = vmatpush1.bf16.msra.mxu0 0
  %194 = vmatprep.subr.bf16.mxu0 0
  %195 = vmatpush1.bf16.msra.mxu0 0
  %196 = vmatprep.subr.bf16.mxu0 0
  %197 = vmatpush1.bf16.msra.mxu0 %v178
  %198 = vmatprep.subr.bf16.mxu0 0
  %199 = vmatpush1.bf16.msra.mxu0 %v177
  %200 = vmatprep.subr.bf16.mxu0 0
  %201 = vmatpush2.bf16.msra.mxu0 0
  %202 = vmatprep.subr.bf16.mxu0 0
  %203 = vmatpush2.bf16.msra.mxu0 0
  %204 = vmatprep.subr.bf16.mxu0 0
  %205 = vmatpush2.bf16.msra.mxu0 0
  %206 = vmatprep.subr.bf16.mxu0 0
  %207 = vmatpush2.bf16.msra.mxu0 0
  %208 = vmatprep.subr.bf16.mxu0 0
  %209 = vmatpush2.bf16.msra.mxu0 0
  %210 = vmatprep.subr.bf16.mxu0 0
  %211 = vmatpush2.bf16.msra.mxu0 0
  %212 = vmatprep.subr.bf16.mxu0 0
  %213 = vmatpush2.bf16.msra.mxu0 0
  %214 = vmatprep.subr.bf16.mxu0 0
  %215 = vmatpush2.bf16.msra.mxu0 0
  %216 = vmatprep.mubr.bf16.mxu0 0
  %217 = vmatmul.mubr.bf16.gmra.mxu0 %v182
  %v218 = vpop.f32.mrf.mxu0
  %v219 = vadd.f32 %v167, %v218
  %v220 = vpop.f32.mrf.mxu0
  %v221 = vpop.f32.mrf.mxu0
  %v222 = vpop.f32.mrf.mxu0
  %223 = vdwg.mxu0
  %vm224 = vcmask 64512
  %225 = vst.msk [vmem:[%s7] sm:$0xff] %vm224, %v219
  // Predicated region
  $region30: #{net_forward.1} parent=0 // pred_check
    _
  $region31: #{net_forward.1} parent=0 // pred_check_branch
    %227 = sbr.rel (0) target = $region33
  $region32: #{net_forward.1} parent=0 // pred_region
    _
  $region33: #{net_forward.1} parent=0 // pred_fallthru
    _
  // Predicated region
  $region34: #{net_forward.1} parent=0 // pred_check
    _
  $region35: #{net_forward.1} parent=0 // pred_check_branch
    %229 = sbr.rel (0) target = $region37
  $region36: #{net_forward.1} parent=0 // pred_region
    _
  $region37: #{net_forward.1} parent=0 // pred_fallthru
    _

</llo_original>
